<compile_context>
chip_gen: v7x
topology: tpu7x:2x2x1
jax: 0.10.0
libtpu: 0.0.40
codegen_flags: <defaults>
</compile_context>

<pallas_src>
import functools

import jax
import jax.numpy as jnp
from jax.experimental import pallas as pl
from jax.experimental.pallas import tpu as pltpu


def _align(n, m):
    return ((n + m - 1) // m) * m


# ---------------------------------------------------------------------------
# Parameter packing: one (rows, C) f32 buffer holding W1^T, b1, W2^T, b2, w3,
# b3.  Sections start on 8-row (sublane) boundaries so static in-kernel slices
# never straddle tiles; biases/w3 are stored as COLUMNS so they broadcast
# along lanes in the feature-major (batch-on-lanes) layout.
# ---------------------------------------------------------------------------
def _param_layout(d_in, h):
    r_w1 = 0                       # W1^T : (H, D_in)
    r_b1 = _align(r_w1 + h, 8)     # b1   : (H, 1)
    r_w2 = _align(r_b1 + h, 8)     # W2^T : (H, H)
    r_b2 = _align(r_w2 + h, 8)     # b2   : (H, 1)
    r_w3 = _align(r_b2 + h, 8)     # w3   : (H, 1)
    r_b3 = _align(r_w3 + h, 8)     # b3   : (1, 1)
    rows = _align(r_b3 + 1, 8)
    cols = max(d_in, h)
    return {"r_w1": r_w1, "r_b1": r_b1, "r_w2": r_w2, "r_b2": r_b2,
            "r_w3": r_w3, "r_b3": r_b3, "rows": rows, "cols": cols}


def pack_params(params, d_in, h):
    """Pack (pre-transposed) w1,b1,w2,b2,w3,b3 into one (rows, C) f32 buffer."""
    L = _param_layout(d_in, h)
    buf = jnp.zeros((L["rows"], L["cols"]), jnp.float32)
    buf = buf.at[L["r_w1"]:L["r_w1"] + h, :d_in].set(params["w1"].T)      # (H, D_in)
    buf = buf.at[L["r_b1"]:L["r_b1"] + h, 0].set(params["b1"].reshape(h))
    buf = buf.at[L["r_w2"]:L["r_w2"] + h, :h].set(params["w2"].T)         # (H, H)
    buf = buf.at[L["r_b2"]:L["r_b2"] + h, 0].set(params["b2"].reshape(h))
    buf = buf.at[L["r_w3"]:L["r_w3"] + h, 0].set(params["w3"].reshape(h)) # column
    buf = buf.at[L["r_b3"], 0].set(params["b3"].reshape(()))
    return buf


# ---------------------------------------------------------------------------
# Kernel: one feature-major batch tile (D_in, TB) against the VMEM-resident
# packed parameters; emits a lane-dense (1, TB) output row.
# ---------------------------------------------------------------------------
def _mlp_kernel(xt_ref, p_ref, o_ref, *, d_in, h, layout):
    xt = xt_ref[...]                                              # (D_in, TB)

    w1t = p_ref[layout["r_w1"]:layout["r_w1"] + h, 0:d_in]        # (H, D_in)
    b1 = p_ref[layout["r_b1"]:layout["r_b1"] + h, 0:1]            # (H, 1)
    w2t = p_ref[layout["r_w2"]:layout["r_w2"] + h, 0:h]           # (H, H)
    b2 = p_ref[layout["r_b2"]:layout["r_b2"] + h, 0:1]            # (H, 1)
    w3 = p_ref[layout["r_w3"]:layout["r_w3"] + h, 0:1]            # (H, 1)
    b3 = p_ref[layout["r_b3"]:layout["r_b3"] + 1, 0:1]            # (1, 1)

    # Layers 1 & 2 on the MXU (f32 accumulation), bias + ReLU on the VPU.
    # Batch stays on lanes throughout: full MXU output width, full vregs.
    h1 = jnp.maximum(jnp.dot(w1t, xt, preferred_element_type=jnp.float32) + b1, 0.0)
    h2 = jnp.maximum(jnp.dot(w2t, h1, preferred_element_type=jnp.float32) + b2, 0.0)
    # Layer 3 (out_features == 1): VPU multiply + sublane reduction -> (1, TB).
    out = jnp.sum(h2 * w3, axis=0, keepdims=True) + b3
    o_ref[...] = out.astype(o_ref.dtype)


# ---------------------------------------------------------------------------
# Wrapper
# ---------------------------------------------------------------------------
def _choose_tb(B, *, max_tb=4096, min_steps=4):
    """Lane-aligned batch tile: multiple of 256 (full v6e/v7x MXU width),
    targeting >= min_steps grid steps (>= 2 pipelined steps per v7x core),
    capped at max_tb.  VMEM stays tiny even at the cap."""
    b_pad = _align(B, 256)
    tb = max(256, _align(pl.cdiv(B, min_steps), 256))
    return min(tb, max_tb, b_pad)


def discriminator_forward(x, packed_params, *, d_in, h, tb=None):
    """3-layer MLP discriminator. x: (B, D_in) f32 -> (B, 1) f32."""
    B = x.shape[0]
    layout = _param_layout(d_in, h)
    if tb is None:
        tb = _choose_tb(B)
    num_tiles = pl.cdiv(B, tb)
    b_pad = num_tiles * tb

    # Feature-major layout: batch on lanes.  Transpose once in the wrapper;
    # pad the batch so every tile (and the output row) is exact.
    xt = x.T                                                      # (D_in, B)
    if b_pad != B:
        xt = jnp.pad(xt, ((0, 0), (0, b_pad - B)))

    kernel = functools.partial(_mlp_kernel, d_in=d_in, h=h, layout=layout)
    out_row = pl.pallas_call(
        kernel,
        out_shape=jax.ShapeDtypeStruct((1, b_pad), jnp.float32),
        grid=(num_tiles,),
        in_specs=[
            # Batch-tiled activations: double-buffered prefetch per grid step.
            pl.BlockSpec((d_in, tb), lambda i: (0, i)),
            # Packed params: constant block index -> DMA'd once, VMEM-resident.
            # TODO(synk): pipeline_mode=pl.Buffered(1) would drop the idle
            # second buffer; negligible at this parameter size.
            pl.BlockSpec((layout["rows"], layout["cols"]), lambda i: (0, 0)),
        ],
        # Lane-dense output: each step writes a full (1, tb) lane block.
        out_specs=pl.BlockSpec((1, tb), lambda i: (0, i)),
        compiler_params=pltpu.CompilerParams(
            # Batch tiles are independent -> shard across v7x's 2 TensorCores
            # (harmless on v5e/v6e).
            dimension_semantics=("parallel",)),
    )(xt, packed_params)

    return out_row.reshape(b_pad)[:B].reshape(B, 1)


# ---------------------------------------------------------------------------
# Init + pure-JAX reference (matches torch.nn.Linear default init/semantics)
# ---------------------------------------------------------------------------
def init_params(key, d_in, h):
    ks = jax.random.split(key, 6)

    def lin(kw, kb, fan_in, fan_out):
        bound = 1.0 / jnp.sqrt(jnp.float32(fan_in))
        w = jax.random.uniform(kw, (fan_in, fan_out), jnp.float32, -bound, bound)
        b = jax.random.uniform(kb, (1, fan_out), jnp.float32, -bound, bound)
        return w, b

    w1, b1 = lin(ks[0], ks[1], d_in, h)
    w2, b2 = lin(ks[2], ks[3], h, h)
    w3, b3 = lin(ks[4], ks[5], h, 1)
    return {"w1": w1, "b1": b1, "w2": w2, "b2": b2, "w3": w3, "b3": b3}


def reference_forward(x, p):
    h1 = jnp.maximum(x @ p["w1"] + p["b1"], 0.0)
    h2 = jnp.maximum(h1 @ p["w2"] + p["b2"], 0.0)
    return h2 @ p["w3"] + p["b3"]


if __name__ == "__main__":
    key = jax.random.PRNGKey(0)
    k_x, k_p = jax.random.split(key)

    # Shapes consistent with Discriminator(D_in, H); batch large enough to
    # exercise the multi-step batch-tiled grid (tb=256 -> grid=(4,)).
    B, D_in, H = 1024, 16, 32
    x = jax.random.normal(k_x, (B, D_in), jnp.float32)
    params = init_params(k_p, D_in, H)
    packed = pack_params(params, D_in, H)

    out = discriminator_forward(x, packed, d_in=D_in, h=H)
    out = jax.block_until_ready(out)

    ref = reference_forward(x, params)
    assert out.shape == (B, 1)
    assert jnp.allclose(out, ref, atol=1e-5, rtol=1e-5), "Pallas output mismatch"
    print("KERNEL_OK")
</pallas_src>

<mosaic_0001>
module attributes {stable_mosaic.version = 11 : i64} {
  func.func @_mlp_kernel(%arg0: i32, %arg1: memref<16x256xf32, #tpu.memory_space<vmem>>, %arg2: memref<168x32xf32, #tpu.memory_space<vmem>>, %arg3: memref<1x256xf32, #tpu.memory_space<vmem>>) attributes {dimension_semantics = [#tpu.dimension_semantics<parallel>], iteration_bounds = array<i64: 4>, scalar_prefetch = 0 : i64, scratch_operands = 0 : i64, tpu.core_type = #tpu.core_type<tc>, window_params = [{transform_indices = @transform_0, window_bounds = array<i64: 16, 256>}, {pipeline_mode = #tpu.pipeline_mode<synchronous>, transform_indices = @transform_1, window_bounds = array<i64: 168, 32>}, {transform_indices = @transform_2, window_bounds = array<i64: 1, 256>}]} {
    %c0 = arith.constant 0 : index
    %c0_0 = arith.constant 0 : index
    %0 = vector.load %arg1[%c0, %c0_0] : memref<16x256xf32, #tpu.memory_space<vmem>>, vector<16x256xf32>
    %c0_1 = arith.constant 0 : index
    %c0_2 = arith.constant 0 : index
    %1 = vector.load %arg2[%c0_1, %c0_2] : memref<168x32xf32, #tpu.memory_space<vmem>>, vector<32x16xf32>
    %c32 = arith.constant 32 : index
    %c0_3 = arith.constant 0 : index
    %2 = vector.load %arg2[%c32, %c0_3] : memref<168x32xf32, #tpu.memory_space<vmem>>, vector<32x1xf32>
    %c64 = arith.constant 64 : index
    %c0_4 = arith.constant 0 : index
    %3 = vector.load %arg2[%c64, %c0_4] : memref<168x32xf32, #tpu.memory_space<vmem>>, vector<32x32xf32>
    %c96 = arith.constant 96 : index
    %c0_5 = arith.constant 0 : index
    %4 = vector.load %arg2[%c96, %c0_5] : memref<168x32xf32, #tpu.memory_space<vmem>>, vector<32x1xf32>
    %c128 = arith.constant 128 : index
    %c0_6 = arith.constant 0 : index
    %5 = vector.load %arg2[%c128, %c0_6] : memref<168x32xf32, #tpu.memory_space<vmem>>, vector<32x1xf32>
    %c160 = arith.constant 160 : index
    %c0_7 = arith.constant 0 : index
    %6 = vector.load %arg2[%c160, %c0_7] : memref<168x32xf32, #tpu.memory_space<vmem>>, vector<1x1xf32>
    %cst = arith.constant dense<0.000000e+00> : vector<32x256xf32>
    %7 = tpu.matmul %1, %0, %cst {dimension_numbers = #tpu.dot_dimension_numbers<[1], [0], [0], [1], [0, 0, 1, 1], [], []>} : vector<32x16xf32>, vector<16x256xf32>, vector<32x256xf32> -> vector<32x256xf32>
    %8 = vector.broadcast %2 : vector<32x1xf32> to vector<32x256xf32>
    %9 = arith.addf %7, %8 : vector<32x256xf32>
    %cst_8 = arith.constant 0.000000e+00 : f32
    %10 = vector.broadcast %cst_8 : f32 to vector<32x256xf32>
    %11 = arith.maximumf %9, %10 : vector<32x256xf32>
    %cst_9 = arith.constant dense<0.000000e+00> : vector<32x256xf32>
    %12 = tpu.matmul %3, %11, %cst_9 {dimension_numbers = #tpu.dot_dimension_numbers<[1], [0], [0], [1], [0, 0, 1, 1], [], []>} : vector<32x32xf32>, vector<32x256xf32>, vector<32x256xf32> -> vector<32x256xf32>
    %13 = vector.broadcast %4 : vector<32x1xf32> to vector<32x256xf32>
    %14 = arith.addf %12, %13 : vector<32x256xf32>
    %cst_10 = arith.constant 0.000000e+00 : f32
    %15 = vector.broadcast %cst_10 : f32 to vector<32x256xf32>
    %16 = arith.maximumf %14, %15 : vector<32x256xf32>
    %17 = vector.broadcast %5 : vector<32x1xf32> to vector<32x256xf32>
    %18 = arith.mulf %16, %17 : vector<32x256xf32>
    %cst_11 = arith.constant dense<0.000000e+00> : vector<256xf32>
    %19 = vector.multi_reduction <add>, %18, %cst_11 [0] : vector<32x256xf32> to vector<256xf32>
    %20 = vector.shape_cast %19 : vector<256xf32> to vector<1x256xf32>
    %21 = vector.broadcast %6 : vector<1x1xf32> to vector<1x256xf32>
    %22 = arith.addf %20, %21 : vector<1x256xf32>
    %c0_12 = arith.constant 0 : index
    %c0_13 = arith.constant 0 : index
    %23 = vector.load %arg3[%c0_12, %c0_13] : memref<1x256xf32, #tpu.memory_space<vmem>>, vector<1x256xf32>
    tpu.vector_store %arg3[%c0_12, %c0_13], %22 {strides = array<i32>} : memref<1x256xf32, #tpu.memory_space<vmem>>, vector<1x256xf32>,
    return
  }
  func.func @transform_0(%arg0: i32) -> (i32, i32) {
    %c0_i32 = arith.constant 0 : i32
    %c0_i32_0 = arith.constant 0 : i32
    return %c0_i32, %arg0 : i32, i32
  }
  func.func @transform_1(%arg0: i32) -> (i32, i32) {
    %c0_i32 = arith.constant 0 : i32
    %c0_i32_0 = arith.constant 0 : i32
    %c0_i32_1 = arith.constant 0 : i32
    return %c0_i32, %c0_i32_0 : i32, i32
  }
  func.func @transform_2(%arg0: i32) -> (i32, i32) {
    %c0_i32 = arith.constant 0 : i32
    %c0_i32_0 = arith.constant 0 : i32
    return %c0_i32, %arg0 : i32, i32
  }
}

</mosaic_0001>

<llo_original>
// kernel: tpu_custom_call.1
$region0: #{tpu_custom_call.1}
  #allocation0 [shape = 'u32[]', space=smem, size = 0x4, offset = 0x4, fixed_abs, tag = 'smem constant byte address 0x4 - core index']
  #allocation1 [shape = 'u32[144,128]{1,0:T(1,128)}', space=vmem, size = 0x12000, scoped, tag = 'internal scratch']
  %s0 = inlined_call_operand.vmem [shape: f32[16,1024], index: 0, kind: input, shape index: {}]
  %s1 = inlined_call_operand.vmem [shape: f32[168,32], index: 1, kind: input, shape index: {}]
  %s2 = inlined_call_operand.hbm [shape: f32[1,1024], index: 2, kind: output, shape index: {}]
  %s3 = sld [smem:[#allocation0]]
  $region64: #{tpu_custom_call.1} parent=0
    _
  %s5 = ssub.s32 1, %s3
  %s6 = scalar_select 0, %s5, %s3
  $region1: #{tpu_custom_call.1} parent=0
    #allocation2 [shape = 'u8[32768]{0}', space=vmem, size = 0x8000, scoped, tag = 'input window, operand 0']
    #allocation3 [shape = 'u8[2048]{0}', space=vmem, size = 0x800, scoped, tag = 'output window, operand 0']
    #allocation4 [shape = 's32[2]{0}', space=sflag, size = 0x8, scoped, tag = 'scoped memory for tpu_custom_call.1']
    %7 = vsyncpa [#allocation4], 0
    %s8 = scalar_lea.sflag [#allocation4], 1
    %9 = vsyncpa %s8, 0
    loop: start=0, step=1, limit=6
    $region2: #{tpu_custom_call.1} parent=1 // loop_pre_header
      _
    $region3: #{tpu_custom_call.1} parent=1 // loop_header
      %s11 = sphi 0, %s15
      %p12 = scmp.ge.s32.totalorder %s11, 6
      %s21 = sphi 0, %s23
      %s24 = sphi 0, %s21
      %s25 = sphi 0, %s24
      %s41 = sphi 0, %s25
      %s45 = sphi 0, %s45
      %s47 = sphi 0, %s45
      %s48 = sphi 0, %s47
      %s62 = sphi 0, %s48
      %s68 = sphi 0, %s70
      %s71 = sphi 0, %s68
      %s72 = sphi 0, %s71
      %s88 = sphi 0, %s72
    $region4: #{tpu_custom_call.1} parent=1 // loop_header_branch
      %14 = sbr.rel (%p12) target = $region8
    $region5: #{tpu_custom_call.1} parent=1 // loop_body
      %s16 = ssub.s32 %s11, 1
      %s17 = ssub.s32 %s11, 2
      %s18 = sadd.s32 %s11, 1
      %s19 = ssub.s32 %s11, %s18
      %p20 = scmp.eq.s32.totalorder %s19, 0
      %s22 = sadd.s32 %s21, 1
      %s23 = scalar_select %p20, %s21, %s22
      %p26 = pneg %p20
      %p27 = scmp.eq.s32.totalorder %s11, 3
      %p28 = por %p26, %p27
      %p29 = scmp.ne.s32.totalorder %s21, %s24
      %p30 = scmp.eq.s32.totalorder %s11, 0
      %p31 = por %p29, %p30
      %p32 = scmp.ne.s32.totalorder %s21, %s24
      %p33 = scmp.eq.s32.totalorder %s16, 3
      %p34 = por %p32, %p33
      %p35 = scmp.ne.s32.totalorder %s24, %s25
      %p36 = scmp.eq.s32.totalorder %s16, 0
      %p37 = por %p35, %p36
      %p38 = scmp.ne.s32.totalorder %s24, %s25
      %p39 = scmp.eq.s32.totalorder %s17, 3
      %p40 = por %p38, %p39
      %p42 = scmp.ne.s32.totalorder %s25, %s41
      %p43 = scmp.eq.s32.totalorder %s17, 0
      %p44 = por %p42, %p43
      %s46 = sadd.s32 %s45, 1
      %p49 = scmp.eq.s32.totalorder %s11, 3
      %p50 = scmp.ne.s32.totalorder %s45, %s47
      %p51 = scmp.eq.s32.totalorder %s11, 0
      %p52 = por %p50, %p51
      %p53 = scmp.ne.s32.totalorder %s45, %s47
      %p54 = scmp.eq.s32.totalorder %s16, 3
      %p55 = por %p53, %p54
      %p56 = scmp.ne.s32.totalorder %s47, %s48
      %p57 = scmp.eq.s32.totalorder %s16, 0
      %p58 = por %p56, %p57
      %p59 = scmp.ne.s32.totalorder %s47, %s48
      %p60 = scmp.eq.s32.totalorder %s17, 3
      %p61 = por %p59, %p60
      %p63 = scmp.ne.s32.totalorder %s48, %s62
      %p64 = scmp.eq.s32.totalorder %s17, 0
      %p65 = por %p63, %p64
      %s66 = ssub.s32 %s11, %s18
      %p67 = scmp.eq.s32.totalorder %s66, 0
      %s69 = sadd.s32 %s68, 1
      %s70 = scalar_select %p67, %s68, %s69
      %p73 = pneg %p67
      %p74 = scmp.eq.s32.totalorder %s11, 3
      %p75 = por %p73, %p74
      %p76 = scmp.ne.s32.totalorder %s68, %s71
      %p77 = scmp.eq.s32.totalorder %s11, 0
      %p78 = por %p76, %p77
      %p79 = scmp.ne.s32.totalorder %s68, %s71
      %p80 = scmp.eq.s32.totalorder %s16, 3
      %p81 = por %p79, %p80
      %p82 = scmp.ne.s32.totalorder %s71, %s72
      %p83 = scmp.eq.s32.totalorder %s16, 0
      %p84 = por %p82, %p83
      %p85 = scmp.ne.s32.totalorder %s71, %s72
      %p86 = scmp.eq.s32.totalorder %s17, 3
      %p87 = por %p85, %p86
      %p89 = scmp.ne.s32.totalorder %s72, %s88
      %p90 = scmp.eq.s32.totalorder %s17, 0
      %p91 = por %p89, %p90
      %p92 = scmp.le.s32.totalorder 1, %s11
      %p93 = scmp.lt.s32.totalorder %s11, 5
      %p94 = pnand %p92, %p93
      %p95 = pneg %p94
      // Predicated region
      $region9: #{tpu_custom_call.1} parent=5 // pred_check
        _
      $region10: #{tpu_custom_call.1} parent=5 // pred_check_branch
        %97 = sbr.rel (%p94) target = $region12
      $region11: #{tpu_custom_call.1} parent=5 // pred_region
        %s98 = ssub.s32 %s11, 1
        // Predicated region
        $region13: #{tpu_custom_call.1} parent=11 // pred_check
          %p99 = pneg %p58
        $region14: #{tpu_custom_call.1} parent=11 // pred_check_branch
          %101 = sbr.rel (%p99) target = $region16
        $region15: #{tpu_custom_call.1} parent=11 // pred_region
          _
        $region16: #{tpu_custom_call.1} parent=11 // pred_fallthru
          _
      $region12: #{tpu_custom_call.1} parent=5 // pred_fallthru
        _
      %p102 = scmp.lt.s32.totalorder %s11, 4
      // Predicated region
      $region17: #{tpu_custom_call.1} parent=5 // pred_check
        %p103 = pneg %p102
      $region18: #{tpu_custom_call.1} parent=5 // pred_check_branch
        %105 = sbr.rel (%p103) target = $region20
      $region19: #{tpu_custom_call.1} parent=5 // pred_region
        // Predicated region
        $region21: #{tpu_custom_call.1} parent=19 // pred_check
          %p106 = pneg %p31
        $region22: #{tpu_custom_call.1} parent=19 // pred_check_branch
          %108 = sbr.rel (%p106) target = $region24
        $region23: #{tpu_custom_call.1} parent=19 // pred_region
          %s109 = sand.u32 %s21, 1
          %s110 = sand.u32 %s21, 1
          %s111 = smul.addr %s110, 32
          %s112 = scalar_lea.vmem [#allocation2], %s111
          %s113 = smul.u32 2, %s11
          %s114 = smul.addr %s113, 8
          %s115 = scalar_lea.vmem %s0, %s114
          // Predicated region
          $region25: #{tpu_custom_call.1} parent=23 // pred_check
            _
          $region26: #{tpu_custom_call.1} parent=23 // pred_check_branch
            %117 = sbr.rel (0) target = $region28
          $region27: #{tpu_custom_call.1} parent=23 // pred_region
            // Predicated region
            $region29: #{tpu_custom_call.1} parent=27 // pred_check
              _
            $region30: #{tpu_custom_call.1} parent=27 // pred_check_branch
              %119 = sbr.rel (0) target = $region32
            $region31: #{tpu_custom_call.1} parent=27 // pred_region
              loop: start=0, step=1, limit=1
              $region33: #{tpu_custom_call.1} parent=31 // loop_pre_header
                _
              $region34: #{tpu_custom_call.1} parent=31 // loop_header
                %s121 = sphi 0, %s125
                %p122 = scmp.ge.s32.totalorder %s121, 1
                %s126 = sphi %s115, %s115
                %s127 = sphi %s112, %s112
              $region35: #{tpu_custom_call.1} parent=31 // loop_header_branch
                %124 = sbr.rel (%p122) target = $region39
              $region36: #{tpu_custom_call.1} parent=31 // loop_body
                %v128 = vld [vmem:[%s126] sm:$0xff]
                %129 = vst [vmem:[%s127] sm:$0xff] %v128
                %v130 = vld [vmem:[%s126 + $0x8] sm:$0xff]
                %131 = vst [vmem:[%s127 + $0x8] sm:$0xff] %v130
                %v132 = vld [vmem:[%s126 + $0x40] sm:$0xff]
                %133 = vst [vmem:[%s127 + $0x10] sm:$0xff] %v132
                %v134 = vld [vmem:[%s126 + $0x48] sm:$0xff]
                %135 = vst [vmem:[%s127 + $0x18] sm:$0xff] %v134
              $region37: #{tpu_custom_call.1} parent=31 // loop_footer
                %s125 = sadd.s32 1, %s121
              $region38: #{tpu_custom_call.1} parent=31 // loop_footer_branch
                %120 = sbr.rel target = $region34
              $region39: #{tpu_custom_call.1} parent=31 // loop_exit
                _
            $region32: #{tpu_custom_call.1} parent=27 // pred_fallthru
              _
            // Predicated region
            $region40: #{tpu_custom_call.1} parent=27 // pred_check
              _
            $region41: #{tpu_custom_call.1} parent=27 // pred_check_branch
              %137 = sbr.rel target = $region43
            $region42: #{tpu_custom_call.1} parent=27 // pred_region
              _
            $region43: #{tpu_custom_call.1} parent=27 // pred_fallthru
              _
          $region28: #{tpu_custom_call.1} parent=23 // pred_fallthru
            _
          %138 = vnop
        $region24: #{tpu_custom_call.1} parent=19 // pred_fallthru
          _
      $region20: #{tpu_custom_call.1} parent=5 // pred_fallthru
        _
      %p139 = scmp.le.s32.totalorder 1, %s11
      %p140 = scmp.lt.s32.totalorder %s11, 5
      %p141 = pnand %p139, %p140
      %p142 = pneg %p141
      // Predicated region
      $region44: #{tpu_custom_call.1} parent=5 // pred_check
        _
      $region45: #{tpu_custom_call.1} parent=5 // pred_check_branch
        %144 = sbr.rel (%p141) target = $region47
      $region46: #{tpu_custom_call.1} parent=5 // pred_region
        %s145 = ssub.s32 %s11, 1
        %s146 = sand.u32 %s24, 1
        %s147 = sand.u32 %s24, 1
        %s148 = smul.addr %s147, 32
        %s149 = scalar_lea.vmem [#allocation2], %s148
        // Predicated region
        $region48: #{tpu_custom_call.1} parent=46 // pred_check
          %p150 = pneg %p37
        $region49: #{tpu_custom_call.1} parent=46 // pred_check_branch
          %152 = sbr.rel (%p150) target = $region51
        $region50: #{tpu_custom_call.1} parent=46 // pred_region
          _
        $region51: #{tpu_custom_call.1} parent=46 // pred_fallthru
          _
        %s153 = sand.u32 %s24, 1
        %s154 = sand.u32 %s24, 1
        %s155 = smul.addr %s154, 32
        %s156 = scalar_lea.vmem [#allocation2], %s155
        %p157 = pneg %p37
        %p158 = pneg %p34
        %p159 = pneg %p58
        %p160 = pneg %p55
        %p161 = pneg %p84
        %p162 = pneg %p81
        %s163 = sand.u32 %s71, 1
        %s164 = scalar_lea.sflag [#allocation4], %s163
        %s165 = sand.u32 %s71, 1
        %s166 = smul.addr %s165, 2
        %s167 = scalar_lea.vmem [#allocation3], %s166
        %s168 = smul.u32 2, %s16
        %s169 = smul.u32 2, %s16
        %v170 = vld [vmem:[%s149] sm:$0xff]
        %v171 = vld [vmem:[%s149 + $0x8] sm:$0xff]
        %v172 = vld [vmem:[%s149 + $0x10] sm:$0xff]
        %v173 = vld [vmem:[%s149 + $0x18] sm:$0xff]
        %v174 = vld [vmem:[%s1] sm:$0xff]
        %v175 = vld [vmem:[%s1 + $0x8] sm:$0xff]
        %v176 = vld [vmem:[%s1 + $0x10] sm:$0xff]
        %v177 = vld [vmem:[%s1 + $0x18] sm:$0xff]
        %v178 = vld [vmem:[%s1 + $0x20] sm:$0xff]
        %v179 = vld [vmem:[%s1 + $0x28] sm:$0xff]
        %v180 = vld [vmem:[%s1 + $0x30] sm:$0xff]
        %v181 = vld [vmem:[%s1 + $0x38] sm:$0xff]
        %v182 = vld [vmem:[%s1 + $0x40] sm:$0xff]
        %v183 = vld [vmem:[%s1 + $0x48] sm:$0xff]
        %v184 = vld [vmem:[%s1 + $0x50] sm:$0xff]
        %v185 = vld [vmem:[%s1 + $0x58] sm:$0xff]
        %v186 = vld [vmem:[%s1 + $0x60] sm:$0xff]
        %v187 = vld [vmem:[%s1 + $0x68] sm:$0xff]
        %v188 = vld [vmem:[%s1 + $0x70] sm:$0xff]
        %v189 = vld [vmem:[%s1 + $0x78] sm:$0xff]
        %v190 = vld [vmem:[%s1 + $0x80] sm:$0xff]
        %v191 = vld [vmem:[%s1 + $0x88] sm:$0xff]
        %v192 = vld [vmem:[%s1 + $0x90] sm:$0xff]
        %v193 = vld [vmem:[%s1 + $0x98] sm:$0xff]
        %v194 = vld [vmem:[%s1 + $0xa0] sm:$0x1]
        %196 = vset.pattern.permute.xlu0 0
        %197 = vperm.xlu0 %196, %v178
        %v198 = vpop.permute.xlu0 %197
        %201 = vset.pattern.permute.xlu0 0
        %202 = vperm.xlu0 %201, %v179
        %v203 = vpop.permute.xlu0 %202
        %206 = vset.pattern.permute.xlu0 0
        %207 = vperm.xlu0 %206, %v180
        %v208 = vpop.permute.xlu0 %207
        %211 = vset.pattern.permute.xlu0 0
        %212 = vperm.xlu0 %211, %v181
        %v213 = vpop.permute.xlu0 %212
        %vm215 = vcmask 130048
        %v217 = vsel %vm215, %v174, 0
        %v220 = vsel %vm215, %v175, 0
        %v223 = vsel %vm215, %v176, 0
        %v226 = vsel %vm215, %v177, 0
        %228 = vmatprep.subr.mxu0 %v171
        %229 = vmatpush1.msra.mxu0 %v170
        %230 = vmatprep.subr.mxu0 %v173
        %231 = vmatpush1.msra.mxu0 %v172
        %232 = vmatprep.subr.mxu0 0.0
        %233 = vmatpush1.msra.mxu0 0.0
        %234 = vmatprep.subr.mxu0 0.0
        %235 = vmatpush1.msra.mxu0 0.0
        %236 = vmatprep.subr.mxu0 0.0
        %237 = vmatpush1.msra.mxu0 0.0
        %238 = vmatprep.subr.mxu0 0.0
        %239 = vmatpush1.msra.mxu0 0.0
        %240 = vmatprep.subr.mxu0 0.0
        %241 = vmatpush1.msra.mxu0 0.0
        %242 = vmatprep.subr.mxu0 0.0
        %243 = vmatpush1.msra.mxu0 0.0
        %244 = vmatprep.subr.mxu0 0.0
        %245 = vmatpush1.msra.mxu0 0.0
        %246 = vmatprep.subr.mxu0 0.0
        %247 = vmatpush1.msra.mxu0 0.0
        %248 = vmatprep.subr.mxu0 0.0
        %249 = vmatpush1.msra.mxu0 0.0
        %250 = vmatprep.subr.mxu0 0.0
        %251 = vmatpush1.msra.mxu0 0.0
        %252 = vmatprep.subr.mxu0 0.0
        %253 = vmatpush1.msra.mxu0 0.0
        %254 = vmatprep.subr.mxu0 0.0
        %255 = vmatpush1.msra.mxu0 0.0
        %256 = vmatprep.subr.mxu0 0.0
        %257 = vmatpush1.msra.mxu0 0.0
        %258 = vmatprep.subr.mxu0 0.0
        %259 = vmatpush1.msra.mxu0 0.0
        %260 = vmatprep.subr.mxu0 0.0
        %261 = vmatpush1.msra.mxu0 0.0
        %262 = vmatprep.subr.mxu0 0.0
        %263 = vmatpush1.msra.mxu0 0.0
        %264 = vmatprep.subr.mxu0 0.0
        %265 = vmatpush1.msra.mxu0 0.0
        %266 = vmatprep.subr.mxu0 0.0
        %267 = vmatpush1.msra.mxu0 0.0
        %268 = vmatprep.subr.mxu0 0.0
        %269 = vmatpush1.msra.mxu0 0.0
        %270 = vmatprep.subr.mxu0 0.0
        %271 = vmatpush1.msra.mxu0 0.0
        %272 = vmatprep.subr.mxu0 0.0
        %273 = vmatpush1.msra.mxu0 0.0
        %274 = vmatprep.subr.mxu0 0.0
        %275 = vmatpush1.msra.mxu0 0.0
        %276 = vmatprep.subr.mxu0 0.0
        %277 = vmatpush1.msra.mxu0 0.0
        %278 = vmatprep.subr.mxu0 0.0
        %279 = vmatpush1.msra.mxu0 0.0
        %280 = vmatprep.subr.mxu0 0.0
        %281 = vmatpush1.msra.mxu0 0.0
        %282 = vmatprep.subr.mxu0 0.0
        %283 = vmatpush1.msra.mxu0 0.0
        %284 = vmatprep.subr.mxu0 0.0
        %285 = vmatpush1.msra.mxu0 0.0
        %286 = vmatprep.subr.mxu0 0.0
        %287 = vmatpush1.msra.mxu0 0.0
        %288 = vmatprep.subr.mxu0 0.0
        %289 = vmatpush1.msra.mxu0 0.0
        %290 = vmatprep.subr.mxu0 0.0
        %291 = vmatpush1.msra.mxu0 0.0
        %292 = vmatprep.mubr.f32.mxu0 0.0
        %293 = vmatmul.mubr.f32.gmra.mrb[0].mxu0 %v217
        %v294 = vpop.f32.mrb[0].mxu0
        %v295 = vadd.f32 %v198, %v294
        %v296 = vpop.f32.mrb[0].mxu0
        %v297 = vadd.f32 %v198, %v296
        %298 = vmatprep.mubr.f32.mxu0 0.0
        %299 = vmatmul.mubr.f32.gmra.mrb[0].mxu0 %v220
        %v300 = vpop.f32.mrb[0].mxu0
        %v301 = vadd.f32 %v203, %v300
        %v302 = vpop.f32.mrb[0].mxu0
        %v303 = vadd.f32 %v203, %v302
        %304 = vmatprep.mubr.f32.mxu0 0.0
        %305 = vmatmul.mubr.f32.gmra.mrb[0].mxu0 %v223
        %v306 = vpop.f32.mrb[0].mxu0
        %v307 = vadd.f32 %v208, %v306
        %v308 = vpop.f32.mrb[0].mxu0
        %v309 = vadd.f32 %v208, %v308
        %310 = vmatprep.mubr.f32.mxu0 0.0
        %311 = vmatmul.mubr.f32.gmra.mrb[0].mxu0 %v226
        %v312 = vpop.f32.mrb[0].mxu0
        %v313 = vadd.f32 %v213, %v312
        %v314 = vpop.f32.mrb[0].mxu0
        %v315 = vadd.f32 %v213, %v314
        %316 = vdwg.mxu0
        %v317 = vmax.f32 %v295, 0.0
        %v318 = vmax.f32 %v297, 0.0
        %v319 = vmax.f32 %v301, 0.0
        %v320 = vmax.f32 %v303, 0.0
        %v321 = vmax.f32 %v307, 0.0
        %v322 = vmax.f32 %v309, 0.0
        %v323 = vmax.f32 %v313, 0.0
        %v324 = vmax.f32 %v315, 0.0
        %326 = vset.pattern.permute.xlu0 0
        %327 = vperm.xlu0 %326, %v186
        %v328 = vpop.permute.xlu0 %327
        %331 = vset.pattern.permute.xlu0 0
        %332 = vperm.xlu0 %331, %v187
        %v333 = vpop.permute.xlu0 %332
        %336 = vset.pattern.permute.xlu0 0
        %337 = vperm.xlu0 %336, %v188
        %v338 = vpop.permute.xlu0 %337
        %341 = vset.pattern.permute.xlu0 0
        %342 = vperm.xlu0 %341, %v189
        %v343 = vpop.permute.xlu0 %342
        %vm345 = vcmask 261120
        %v347 = vsel %vm345, %v182, 0
        %v350 = vsel %vm345, %v183, 0
        %v353 = vsel %vm345, %v184, 0
        %v356 = vsel %vm345, %v185, 0
        %358 = vmatprep.subr.mxu0 %v318
        %359 = vmatpush1.msra.mxu0 %v317
        %360 = vmatprep.subr.mxu0 %v320
        %361 = vmatpush1.msra.mxu0 %v319
        %362 = vmatprep.subr.mxu0 %v322
        %363 = vmatpush1.msra.mxu0 %v321
        %364 = vmatprep.subr.mxu0 %v324
        %365 = vmatpush1.msra.mxu0 %v323
        %366 = vmatprep.subr.mxu0 0.0
        %367 = vmatpush1.msra.mxu0 0.0
        %368 = vmatprep.subr.mxu0 0.0
        %369 = vmatpush1.msra.mxu0 0.0
        %370 = vmatprep.subr.mxu0 0.0
        %371 = vmatpush1.msra.mxu0 0.0
        %372 = vmatprep.subr.mxu0 0.0
        %373 = vmatpush1.msra.mxu0 0.0
        %374 = vmatprep.subr.mxu0 0.0
        %375 = vmatpush1.msra.mxu0 0.0
        %376 = vmatprep.subr.mxu0 0.0
        %377 = vmatpush1.msra.mxu0 0.0
        %378 = vmatprep.subr.mxu0 0.0
        %379 = vmatpush1.msra.mxu0 0.0
        %380 = vmatprep.subr.mxu0 0.0
        %381 = vmatpush1.msra.mxu0 0.0
        %382 = vmatprep.subr.mxu0 0.0
        %383 = vmatpush1.msra.mxu0 0.0
        %384 = vmatprep.subr.mxu0 0.0
        %385 = vmatpush1.msra.mxu0 0.0
        %386 = vmatprep.subr.mxu0 0.0
        %387 = vmatpush1.msra.mxu0 0.0
        %388 = vmatprep.subr.mxu0 0.0
        %389 = vmatpush1.msra.mxu0 0.0
        %390 = vmatprep.subr.mxu0 0.0
        %391 = vmatpush1.msra.mxu0 0.0
        %392 = vmatprep.subr.mxu0 0.0
        %393 = vmatpush1.msra.mxu0 0.0
        %394 = vmatprep.subr.mxu0 0.0
        %395 = vmatpush1.msra.mxu0 0.0
        %396 = vmatprep.subr.mxu0 0.0
        %397 = vmatpush1.msra.mxu0 0.0
        %398 = vmatprep.subr.mxu0 0.0
        %399 = vmatpush1.msra.mxu0 0.0
        %400 = vmatprep.subr.mxu0 0.0
        %401 = vmatpush1.msra.mxu0 0.0
        %402 = vmatprep.subr.mxu0 0.0
        %403 = vmatpush1.msra.mxu0 0.0
        %404 = vmatprep.subr.mxu0 0.0
        %405 = vmatpush1.msra.mxu0 0.0
        %406 = vmatprep.subr.mxu0 0.0
        %407 = vmatpush1.msra.mxu0 0.0
        %408 = vmatprep.subr.mxu0 0.0
        %409 = vmatpush1.msra.mxu0 0.0
        %410 = vmatprep.subr.mxu0 0.0
        %411 = vmatpush1.msra.mxu0 0.0
        %412 = vmatprep.subr.mxu0 0.0
        %413 = vmatpush1.msra.mxu0 0.0
        %414 = vmatprep.subr.mxu0 0.0
        %415 = vmatpush1.msra.mxu0 0.0
        %416 = vmatprep.subr.mxu0 0.0
        %417 = vmatpush1.msra.mxu0 0.0
        %418 = vmatprep.subr.mxu0 0.0
        %419 = vmatpush1.msra.mxu0 0.0
        %420 = vmatprep.subr.mxu0 0.0
        %421 = vmatpush1.msra.mxu0 0.0
        %422 = vmatprep.mubr.f32.mxu0 0.0
        %423 = vmatmul.mubr.f32.gmra.mrb[0].mxu0 %v347
        %v424 = vpop.f32.mrb[0].mxu0
        %v425 = vadd.f32 %v328, %v424
        %v426 = vpop.f32.mrb[0].mxu0
        %v427 = vadd.f32 %v328, %v426
        %428 = vmatprep.mubr.f32.mxu0 0.0
        %429 = vmatmul.mubr.f32.gmra.mrb[0].mxu0 %v350
        %v430 = vpop.f32.mrb[0].mxu0
        %v431 = vadd.f32 %v333, %v430
        %v432 = vpop.f32.mrb[0].mxu0
        %v433 = vadd.f32 %v333, %v432
        %434 = vmatprep.mubr.f32.mxu0 0.0
        %435 = vmatmul.mubr.f32.gmra.mrb[0].mxu0 %v353
        %v436 = vpop.f32.mrb[0].mxu0
        %v437 = vadd.f32 %v338, %v436
        %v438 = vpop.f32.mrb[0].mxu0
        %v439 = vadd.f32 %v338, %v438
        %440 = vmatprep.mubr.f32.mxu0 0.0
        %441 = vmatmul.mubr.f32.gmra.mrb[0].mxu0 %v356
        %v442 = vpop.f32.mrb[0].mxu0
        %v443 = vadd.f32 %v343, %v442
        %v444 = vpop.f32.mrb[0].mxu0
        %v445 = vadd.f32 %v343, %v444
        %446 = vdwg.mxu0
        %v447 = vmax.f32 %v425, 0.0
        %v448 = vmax.f32 %v427, 0.0
        %v449 = vmax.f32 %v431, 0.0
        %v450 = vmax.f32 %v433, 0.0
        %v451 = vmax.f32 %v437, 0.0
        %v452 = vmax.f32 %v439, 0.0
        %v453 = vmax.f32 %v443, 0.0
        %v454 = vmax.f32 %v445, 0.0
        %456 = vset.pattern.permute.xlu0 0
        %457 = vperm.xlu0 %456, %v190
        %v458 = vpop.permute.xlu0 %457
        %461 = vset.pattern.permute.xlu0 0
        %462 = vperm.xlu0 %461, %v191
        %v463 = vpop.permute.xlu0 %462
        %466 = vset.pattern.permute.xlu0 0
        %467 = vperm.xlu0 %466, %v192
        %v468 = vpop.permute.xlu0 %467
        %471 = vset.pattern.permute.xlu0 0
        %472 = vperm.xlu0 %471, %v193
        %v473 = vpop.permute.xlu0 %472
        %v475 = vmul.f32 %v447, %v458
        %v476 = vmul.f32 %v448, %v458
        %v477 = vmul.f32 %v449, %v463
        %v478 = vmul.f32 %v450, %v463
        %v479 = vmul.f32 %v451, %v468
        %v480 = vmul.f32 %v452, %v468
        %v481 = vmul.f32 %v453, %v473
        %v482 = vmul.f32 %v454, %v473
        %v483 = vadd.f32 %v475, %v477
        %v484 = vadd.f32 %v483, %v479
        %v485 = vadd.f32 %v484, %v481
        %v486 = vrot.slane %v485, 4
        %v487 = vadd.f32 %v485, %v486
        %v488 = vrot.slane %v487, 2
        %v489 = vadd.f32 %v487, %v488
        %v490 = vrot.slane %v489, 1
        %v491 = vadd.f32 %v489, %v490
        %v492 = vadd.f32 %v476, %v478
        %v493 = vadd.f32 %v492, %v480
        %v494 = vadd.f32 %v493, %v482
        %v495 = vrot.slane %v494, 4
        %v496 = vadd.f32 %v494, %v495
        %v497 = vrot.slane %v496, 2
        %v498 = vadd.f32 %v496, %v497
        %v499 = vrot.slane %v498, 1
        %v500 = vadd.f32 %v498, %v499
        %502 = vset.pattern.permute.xlu0 0
        %503 = vperm.xlu0 %502, %v194
        %v504 = vpop.permute.xlu0 %503
        %v506 = vadd.f32 %v491, %v504
        %v507 = vadd.f32 %v500, %v504
        %v510 = vcombine.low %v506, %v507
        %v512 = vunpack.c.l.s4 1966171168
        %v513 = vunpack.c.0.s8 %v512
        %v514 = vlaneseq
        %v515 = vshrl.u32 %v514, 7
        %v516 = vsub.s32 %v513, %v515
        %v517 = vrot.slane %v510, %v516
        %v519 = vunpack.c.l.s4 1966171168
        %v520 = vunpack.c.0.s8 %v519
        %v521 = vlaneseq
        %v522 = vshrl.u32 %v521, 7
        %v523 = vsub.s32 %v520, %v522
        %v524 = vrot.slane %v517, %v523
        %v526 = vlaneseq
        %vm527 = vcmp.ge.s32.totalorder %v526, 0
        %vm528 = vcmp.lt.s32.totalorder %v526, 256
        %vm529 = vmand %vm527, %vm528
        %530 = vst.msk [vmem:[%s167] sm:$0x3] %vm529, %v524
        %s531 = sand.u32 %s71, 1
        %s532 = scalar_lea.sflag [#allocation4], %s531
        %s533 = sand.u32 %s71, 1
        %s534 = smul.addr %s533, 2
        %s535 = scalar_lea.vmem [#allocation3], %s534
        // Predicated region
        $region52: #{tpu_custom_call.1} parent=46 // pred_check
          %p536 = pneg %p81
        $region53: #{tpu_custom_call.1} parent=46 // pred_check_branch
          %538 = sbr.rel (%p536) target = $region55
        $region54: #{tpu_custom_call.1} parent=46 // pred_region
          %s539 = smul.u32 2, %s16
          %s541 = ssub.s32 32, 32
          %542 = vsyncadd %s532, %s541
          %s543 = smul.addr %s539, 16
          %s544 = scalar_lea.hbm %s2, %s543
          %s546 = sshll.u32 %s535, 4
          %s547 = int_to_ptr.vmem [resolvable:$true] %s546
          %549 = dma.vmem_to_hbm [thread:$0]  %s547, 32, %s544, %s532
        $region55: #{tpu_custom_call.1} parent=46 // pred_fallthru
          _
      $region47: #{tpu_custom_call.1} parent=5 // pred_fallthru
        _
      %p550 = scmp.le.s32.totalorder 2, %s11
      // Predicated region
      $region56: #{tpu_custom_call.1} parent=5 // pred_check
        %p551 = pneg %p550
      $region57: #{tpu_custom_call.1} parent=5 // pred_check_branch
        %553 = sbr.rel (%p551) target = $region59
      $region58: #{tpu_custom_call.1} parent=5 // pred_region
        %s554 = ssub.s32 %s11, 2
        // Predicated region
        $region60: #{tpu_custom_call.1} parent=58 // pred_check
          %p555 = pneg %p87
        $region61: #{tpu_custom_call.1} parent=58 // pred_check_branch
          %557 = sbr.rel (%p555) target = $region63
        $region62: #{tpu_custom_call.1} parent=58 // pred_region
          %s558 = sand.u32 %s72, 1
          %s559 = scalar_lea.sflag [#allocation4], %s558
          %s560 = sand.u32 %s72, 1
          %s561 = smul.addr %s560, 2
          %s562 = scalar_lea.vmem [#allocation3], %s561
          %563 = dma.done %s559, 32
        $region63: #{tpu_custom_call.1} parent=58 // pred_fallthru
          _
      $region59: #{tpu_custom_call.1} parent=5 // pred_fallthru
        _
    $region6: #{tpu_custom_call.1} parent=1 // loop_footer
      %s15 = sadd.s32 1, %s11
    $region7: #{tpu_custom_call.1} parent=1 // loop_footer_branch
      %10 = sbr.rel target = $region3
    $region8: #{tpu_custom_call.1} parent=1 // loop_exit
      _
    %564 = vsyncpa [#allocation4], 1
    %s565 = scalar_lea.sflag [#allocation4], 1
    %566 = vsyncpa %s565, 1

</llo_original>
